<compile_context>
chip_gen: v5e
topology: v5e:2x2
jax: 0.10.0
libtpu: 0.0.40
codegen_flags: <defaults>
</compile_context>

<pallas_src>
from typing import NamedTuple

import jax
import jax.numpy as jnp
from jax.experimental import pallas as pl
from jax.experimental.pallas import tpu as pltpu


def _round_up(n, m):
    return ((n + m - 1) // m) * m


def _hw_vmem():
    """(physical VMEM bytes, scoped-VMEM limit we request)."""
    try:
        cap = int(pltpu.get_tpu_info().vmem_capacity_bytes)
    except Exception:
        cap = 64 << 20  # conservative (v7x-sized) fallback
    # ~100 MiB on 128-MiB chips (v5e/v6e), ~56 MiB on 64-MiB chips (v7x).
    limit = max(32 << 20, min(100 << 20, cap - (8 << 20)))
    return cap, limit


def _default_tiles(hidden, vmem_cap):
    """Generation-dependent tile caps (row tile, intermediate tile)."""
    if vmem_cap >= (100 << 20):        # v5e / v6e: 128 MiB VMEM
        # v6e machine balance ~670 FLOP/byte -> big row tile to amortize the
        # re-streamed weights; v5e is already compute-bound at tm>=256.
        max_tm = 512
        max_ti = 512 if hidden < 8192 else 256
    else:                              # v7x: 64 MiB VMEM, ~3.2 TB/s HBM
        max_tm = 256                   # already ~80% of roofline on v7x
        max_ti = 512 if hidden <= 4096 else 256
    return max_tm, max_ti


def _working_set_bytes(tm, ti, hidden, in_itemsize, out_itemsize):
    """Double-buffered VMEM footprint of one grid step."""
    x_blk = tm * hidden * in_itemsize
    wgu_blk = hidden * 2 * ti * in_itemsize
    wd_blk = ti * hidden * in_itemsize
    out_blk = tm * hidden * out_itemsize
    acc = tm * hidden * 4
    return 2 * (x_blk + wgu_blk + wd_blk + out_blk) + acc


class PreparedMLPWeights(NamedTuple):
    wgu: jax.Array   # (hidden, 2*inter_padded), block-interleaved [Wg_i | Wu_i]
    wd: jax.Array    # (inter_padded, hidden)
    ti: int
    hidden: int
    inter: int


def prepare_llama_mlp_weights(w_gate, w_up, w_down, *, dtype=None, max_ti=None):
    """One-time weight preparation (hoist out of the per-call hot path).

    Args:
      w_gate: (intermediate, hidden)  -- PyTorch nn.Linear weight layout
      w_up:   (intermediate, hidden)
      w_down: (hidden, intermediate)
      dtype:  compute dtype for x/weights (bf16 recommended).
      max_ti: optional cap on the intermediate tile.
    """
    inter, hidden = w_gate.shape
    assert w_up.shape == (inter, hidden)
    assert w_down.shape == (hidden, inter)
    if dtype is None:
        dtype = w_gate.dtype
    isz = jnp.dtype(dtype).itemsize

    vmem_cap, vmem_limit = _hw_vmem()
    d_tm, d_ti = _default_tiles(hidden, vmem_cap)
    if max_ti is None:
        max_ti = d_ti

    if inter <= max_ti:
        ti = inter
        ip = inter
    else:
        ti = max_ti
        # Shrink the intermediate tile until the (worst-case tm) working set
        # fits this generation's scoped-VMEM budget.
        while ti > 128 and _working_set_bytes(d_tm, ti, hidden, isz, isz) > int(
            0.9 * vmem_limit
        ):
            ti //= 2
        ip = _round_up(inter, ti)

    wg = jnp.asarray(w_gate).T.astype(dtype)   # (hidden, inter)
    wu = jnp.asarray(w_up).T.astype(dtype)     # (hidden, inter)
    wd = jnp.asarray(w_down).T.astype(dtype)   # (inter, hidden)
    if ip != inter:
        # Padded columns contribute exactly zero: SiLU(0) * 0 = 0.
        wg = jnp.pad(wg, ((0, 0), (0, ip - inter)))
        wu = jnp.pad(wu, ((0, 0), (0, ip - inter)))
        wd = jnp.pad(wd, ((0, ip - inter), (0, 0)))

    nblk = ip // ti
    # Block-interleave so grid step i streams one contiguous (hidden, 2*ti)
    # slab [Wg_block_i | Wu_block_i]: one BlockSpec, one DMA stream, one MXU
    # matmul for gate+up.
    wgu = jnp.concatenate(
        [wg.reshape(hidden, nblk, ti), wu.reshape(hidden, nblk, ti)], axis=2
    ).reshape(hidden, 2 * ip)

    return PreparedMLPWeights(wgu=wgu, wd=wd, ti=ti, hidden=hidden, inter=inter)


def _mlp_kernel(x_ref, wgu_ref, wd_ref, o_ref, acc_ref):
    """One (tm, hidden) output tile, accumulated over intermediate tiles."""
    i = pl.program_id(1)

    x = x_ref[...]
    # Fused gate+up projection: ONE MXU matmul on the interleaved weight slab.
    gu = jnp.dot(x, wgu_ref[...], preferred_element_type=jnp.float32)
    ti = gu.shape[1] // 2
    g = gu[:, :ti]
    u = gu[:, ti:]
    # SiLU(g) * u in f32 (sigmoid on the EUP, mul on the VPU).
    h = (g * jax.nn.sigmoid(g)) * u
    # Partial down projection for this intermediate slice.
    part = jnp.dot(
        h.astype(wd_ref.dtype), wd_ref[...], preferred_element_type=jnp.float32
    )

    @pl.when(i == 0)
    def _():
        acc_ref[...] = part          # write directly; no zero-fill + reload

    @pl.when(i > 0)
    def _():
        acc_ref[...] += part

    @pl.when(i == pl.num_programs(1) - 1)
    def _():
        o_ref[...] = acc_ref[...].astype(o_ref.dtype)


def llama_mlp_prepared(x, prep: PreparedMLPWeights, *, max_tm=None):
    """Pallas equivalent of LlamaMLP.forward using pre-prepared weights."""
    orig_shape = x.shape
    out_dtype = x.dtype
    hidden, inter, ti = prep.hidden, prep.inter, prep.ti
    ip = prep.wd.shape[0]
    w_dtype = prep.wgu.dtype

    x2d = x.reshape(-1, hidden).astype(w_dtype)
    M = x2d.shape[0]

    vmem_cap, vmem_limit = _hw_vmem()
    if max_tm is None:
        max_tm, _ = _default_tiles(hidden, vmem_cap)

    isz = jnp.dtype(w_dtype).itemsize
    osz = jnp.dtype(out_dtype).itemsize

    # ---- row-tile selection ------------------------------------------------
    tm = max_tm if M > max_tm else _round_up(M, 8)
    while tm > 64 and _working_set_bytes(tm, ti, hidden, isz, osz) > int(
        0.9 * vmem_limit
    ):
        tm = max(64, _round_up(tm // 2, 8))
    # Keep both TensorCores busy on 2-TC chips (v7x) when M is prefill-sized
    # but would otherwise map onto a single row block.
    if vmem_cap < (100 << 20) and M >= 128 and _round_up(M, tm) // tm == 1:
        tm = _round_up((_round_up(M, 8) + 1) // 2, 8)
    mp = _round_up(M, tm)

    if mp != M:
        x2d = jnp.pad(x2d, ((0, mp - M), (0, 0)))

    grid = (mp // tm, ip // ti)
    g_m = grid[0]

    cost = pl.CostEstimate(
        flops=6 * M * hidden * inter,
        transcendentals=M * inter,
        bytes_accessed=mp * hidden * isz
        + 3 * ip * hidden * isz * g_m
        + mp * hidden * osz,
    )

    out = pl.pallas_call(
        _mlp_kernel,
        out_shape=jax.ShapeDtypeStruct((mp, hidden), out_dtype),
        grid_spec=pltpu.PrefetchScalarGridSpec(
            num_scalar_prefetch=0,
            grid=grid,
            in_specs=[
                pl.BlockSpec((tm, hidden), lambda m, i: (m, 0)),       # x
                pl.BlockSpec((hidden, 2 * ti), lambda m, i: (0, i)),   # [Wg|Wu]
                pl.BlockSpec((ti, hidden), lambda m, i: (i, 0)),       # Wd
            ],
            out_specs=pl.BlockSpec((tm, hidden), lambda m, i: (m, 0)),
            scratch_shapes=[pltpu.VMEM((tm, hidden), jnp.float32)],
        ),
        compiler_params=pltpu.CompilerParams(
            dimension_semantics=("parallel", "arbitrary"),
            vmem_limit_bytes=vmem_limit,
        ),
        cost_estimate=cost,
    )(x2d, prep.wgu, prep.wd)

    if mp != M:
        out = out[:M]
    return out.reshape(orig_shape)


def llama_mlp(x, w_gate, w_up, w_down, *, dtype=None, max_tm=None, max_ti=None):
    """Convenience wrapper. In production call prepare_llama_mlp_weights()
    once at weight-load time and reuse the result — the transpose/pad/cast
    below otherwise re-materializes all three weight matrices every call."""
    prep = prepare_llama_mlp_weights(w_gate, w_up, w_down, dtype=dtype, max_ti=max_ti)
    return llama_mlp_prepared(x, prep, max_tm=max_tm)


def _reference(x, w_gate, w_up, w_down):
    """Pure-JAX (f32) reference of the PyTorch module for verification."""
    hp = jax.lax.Precision.HIGHEST
    xf = x.astype(jnp.float32)
    g = jnp.dot(xf, w_gate.T.astype(jnp.float32), precision=hp)
    u = jnp.dot(xf, w_up.T.astype(jnp.float32), precision=hp)
    h = (g * jax.nn.sigmoid(g)) * u
    return jnp.dot(h, w_down.T.astype(jnp.float32), precision=hp)


if __name__ == "__main__":
    key = jax.random.PRNGKey(0)
    k1, k2, k3, k4, k5 = jax.random.split(key, 5)

    # ---- small f32 sanity check (single-tile grid) --------------------------
    batch, seq, hidden, inter = 2, 8, 32, 64
    x = jax.random.normal(k1, (batch, seq, hidden), dtype=jnp.float32)
    w_gate = jax.random.normal(k2, (inter, hidden), dtype=jnp.float32) * 0.05
    w_up = jax.random.normal(k3, (inter, hidden), dtype=jnp.float32) * 0.05
    w_down = jax.random.normal(k4, (hidden, inter), dtype=jnp.float32) * 0.05

    out = jax.block_until_ready(llama_mlp(x, w_gate, w_up, w_down))
    ref = _reference(x, w_gate, w_up, w_down)
    assert out.shape == x.shape and out.dtype == x.dtype
    err = float(jnp.max(jnp.abs(out.astype(jnp.float32) - ref)))
    assert err < 1e-3, f"f32 max err {err}"

    # ---- bf16 multi-tile check (exercises padding on M and intermediate) ----
    hidden2, inter2, batch2, seq2 = 64, 320, 3, 8
    xb = jax.random.normal(k5, (batch2, seq2, hidden2), dtype=jnp.float32)
    wg2 = jax.random.normal(k2, (inter2, hidden2), dtype=jnp.float32) * 0.05
    wu2 = jax.random.normal(k3, (inter2, hidden2), dtype=jnp.float32) * 0.05
    wd2 = jax.random.normal(k4, (hidden2, inter2), dtype=jnp.float32) * 0.05
    xb16 = xb.astype(jnp.bfloat16)
    wg16 = wg2.astype(jnp.bfloat16)
    wu16 = wu2.astype(jnp.bfloat16)
    wd16 = wd2.astype(jnp.bfloat16)

    prep = prepare_llama_mlp_weights(wg16, wu16, wd16, dtype=jnp.bfloat16, max_ti=128)
    out2 = jax.block_until_ready(llama_mlp_prepared(xb16, prep, max_tm=16))
    ref2 = _reference(xb16, wg16, wu16, wd16)
    assert out2.shape == xb16.shape and out2.dtype == jnp.bfloat16
    err2 = float(jnp.max(jnp.abs(out2.astype(jnp.float32) - ref2)))
    assert err2 < 5e-2, f"bf16 max err {err2}"

    print("KERNEL_OK")
</pallas_src>

<mosaic_0001>
module attributes {stable_mosaic.version = 11 : i64} {
  func.func @_mlp_kernel(%arg0: i32, %arg1: i32, %arg2: memref<16x32xf32, #tpu.memory_space<vmem>>, %arg3: memref<32x128xf32, #tpu.memory_space<vmem>>, %arg4: memref<64x32xf32, #tpu.memory_space<vmem>>, %arg5: memref<16x32xf32, #tpu.memory_space<vmem>>, %arg6: memref<16x32xf32, #tpu.memory_space<vmem>>) attributes {dimension_semantics = [#tpu.dimension_semantics<parallel>, #tpu.dimension_semantics<arbitrary>], iteration_bounds = array<i64: 1, 1>, scalar_prefetch = 0 : i64, scratch_operands = 1 : i64, tpu.core_type = #tpu.core_type<tc>, window_params = [{transform_indices = @transform_0, window_bounds = array<i64: 16, 32>}, {transform_indices = @transform_1, window_bounds = array<i64: 32, 128>}, {transform_indices = @transform_2, window_bounds = array<i64: 64, 32>}, {transform_indices = @transform_3, window_bounds = array<i64: 16, 32>}]} {
    %c0 = arith.constant 0 : index
    %c0_0 = arith.constant 0 : index
    %0 = vector.load %arg2[%c0, %c0_0] : memref<16x32xf32, #tpu.memory_space<vmem>>, vector<16x32xf32>
    %c0_1 = arith.constant 0 : index
    %c0_2 = arith.constant 0 : index
    %1 = vector.load %arg3[%c0_1, %c0_2] : memref<32x128xf32, #tpu.memory_space<vmem>>, vector<32x128xf32>
    %cst = arith.constant dense<0.000000e+00> : vector<16x128xf32>
    %2 = tpu.matmul %0, %1, %cst {dimension_numbers = #tpu.dot_dimension_numbers<[1], [0], [0], [1], [0, 0, 1, 1], [], []>} : vector<16x32xf32>, vector<32x128xf32>, vector<16x128xf32> -> vector<16x128xf32>
    %3 = vector.extract_strided_slice %2 {offsets = [0, 0], sizes = [16, 64], strides = [1, 1]} : vector<16x128xf32> to vector<16x64xf32>
    %4 = vector.extract_strided_slice %2 {offsets = [0, 64], sizes = [16, 64], strides = [1, 1]} : vector<16x128xf32> to vector<16x64xf32>
    %5 = arith.negf %3 : vector<16x64xf32>
    %6 = math.exp %5 : vector<16x64xf32>
    %cst_3 = arith.constant 1.000000e+00 : f32
    %7 = vector.broadcast %cst_3 : f32 to vector<16x64xf32>
    %8 = arith.addf %7, %6 : vector<16x64xf32>
    %9 = arith.divf %7, %8 : vector<16x64xf32>
    %10 = arith.mulf %3, %9 : vector<16x64xf32>
    %11 = arith.mulf %10, %4 : vector<16x64xf32>
    %c0_4 = arith.constant 0 : index
    %c0_5 = arith.constant 0 : index
    %12 = vector.load %arg4[%c0_4, %c0_5] : memref<64x32xf32, #tpu.memory_space<vmem>>, vector<64x32xf32>
    %cst_6 = arith.constant dense<0.000000e+00> : vector<16x32xf32>
    %13 = tpu.matmul %11, %12, %cst_6 {dimension_numbers = #tpu.dot_dimension_numbers<[1], [0], [0], [1], [0, 0, 1, 1], [], []>} : vector<16x64xf32>, vector<64x32xf32>, vector<16x32xf32> -> vector<16x32xf32>
    %c0_i32 = arith.constant 0 : i32
    %14 = arith.cmpi eq, %arg1, %c0_i32 : i32
    %15 = arith.extui %14 : i1 to i32
    %c0_i32_7 = arith.constant 0 : i32
    %16 = arith.cmpi ne, %15, %c0_i32_7 : i32
    scf.if %16 {
      %c0_12 = arith.constant 0 : index
      %c0_13 = arith.constant 0 : index
      %23 = vector.load %arg6[%c0_12, %c0_13] : memref<16x32xf32, #tpu.memory_space<vmem>>, vector<16x32xf32>
      tpu.vector_store %arg6[%c0_12, %c0_13], %13 {strides = array<i32>} : memref<16x32xf32, #tpu.memory_space<vmem>>, vector<16x32xf32>,
    } else {
    }
    %c0_i32_8 = arith.constant 0 : i32
    %17 = arith.cmpi sgt, %arg1, %c0_i32_8 : i32
    %18 = arith.extui %17 : i1 to i32
    %c0_i32_9 = arith.constant 0 : i32
    %19 = arith.cmpi ne, %18, %c0_i32_9 : i32
    scf.if %19 {
      %c0_12 = arith.constant 0 : index
      %c0_13 = arith.constant 0 : index
      %23 = vector.load %arg6[%c0_12, %c0_13] : memref<16x32xf32, #tpu.memory_space<vmem>>, vector<16x32xf32>
      %24 = arith.addf %23, %13 : vector<16x32xf32>
      %c0_14 = arith.constant 0 : index
      %c0_15 = arith.constant 0 : index
      %25 = vector.load %arg6[%c0_14, %c0_15] : memref<16x32xf32, #tpu.memory_space<vmem>>, vector<16x32xf32>
      tpu.vector_store %arg6[%c0_14, %c0_15], %24 {strides = array<i32>} : memref<16x32xf32, #tpu.memory_space<vmem>>, vector<16x32xf32>,
    } else {
    }
    %c0_i32_10 = arith.constant 0 : i32
    %20 = arith.cmpi eq, %arg1, %c0_i32_10 : i32
    %21 = arith.extui %20 : i1 to i32
    %c0_i32_11 = arith.constant 0 : i32
    %22 = arith.cmpi ne, %21, %c0_i32_11 : i32
    scf.if %22 {
      %c0_12 = arith.constant 0 : index
      %c0_13 = arith.constant 0 : index
      %23 = vector.load %arg6[%c0_12, %c0_13] : memref<16x32xf32, #tpu.memory_space<vmem>>, vector<16x32xf32>
      %c0_14 = arith.constant 0 : index
      %c0_15 = arith.constant 0 : index
      %24 = vector.load %arg5[%c0_14, %c0_15] : memref<16x32xf32, #tpu.memory_space<vmem>>, vector<16x32xf32>
      tpu.vector_store %arg5[%c0_14, %c0_15], %23 {strides = array<i32>} : memref<16x32xf32, #tpu.memory_space<vmem>>, vector<16x32xf32>,
    } else {
    }
    return
  }
  func.func @transform_0(%arg0: i32, %arg1: i32) -> (i32, i32) {
    %c0_i32 = arith.constant 0 : i32
    %c0_i32_0 = arith.constant 0 : i32
    return %arg0, %c0_i32 : i32, i32
  }
  func.func @transform_1(%arg0: i32, %arg1: i32) -> (i32, i32) {
    %c0_i32 = arith.constant 0 : i32
    %c0_i32_0 = arith.constant 0 : i32
    return %c0_i32, %arg1 : i32, i32
  }
  func.func @transform_2(%arg0: i32, %arg1: i32) -> (i32, i32) {
    %c0_i32 = arith.constant 0 : i32
    %c0_i32_0 = arith.constant 0 : i32
    return %arg1, %c0_i32 : i32, i32
  }
  func.func @transform_3(%arg0: i32, %arg1: i32) -> (i32, i32) {
    %c0_i32 = arith.constant 0 : i32
    %c0_i32_0 = arith.constant 0 : i32
    return %arg0, %c0_i32 : i32, i32
  }
}

</mosaic_0001>

<llo_original>
// kernel: tpu_custom_call.1
$region0: #{tpu_custom_call.1}
  #allocation0 [shape = 'u32[]', space=smem, size = 0x4, offset = 0x4, fixed_abs, tag = 'smem constant byte address 0x4 - core index']
  #allocation1 [shape = 'u32[72,128]{1,0:T(1,128)}', space=vmem, size = 0x9000, scoped, tag = 'internal scratch']
  #allocation2 [shape = 'f32[16,32]{1,0:T(8,128)}', space=vmem, size = 0x2000, scoped, tag = 'scratch operand']
  %s0 = inlined_call_operand.vmem [shape: f32[16,32], index: 0, kind: input, shape index: {}]
  %s1 = inlined_call_operand.vmem [shape: f32[32,128], index: 1, kind: input, shape index: {}]
  %s2 = inlined_call_operand.vmem [shape: f32[64,32], index: 2, kind: input, shape index: {}]
  %s3 = inlined_call_operand.hbm [shape: f32[16,32], index: 3, kind: output, shape index: {}]
  %s4 = sld [smem:[#allocation0]]
  $region34: #{tpu_custom_call.1} parent=0
    _
  %s6 = ssub.s32 1, %s4
  %s7 = scalar_select 0, %s6, %s4
  $region1: #{tpu_custom_call.1} parent=0
    #allocation3 [shape = 'u8[8192]{0}', space=vmem, size = 0x2000, scoped, tag = 'output window, operand 0, single buffered']
    #allocation4 [shape = 's32[1]{0}', space=sflag, size = 0x4, scoped, tag = 'scoped memory for tpu_custom_call.1']
    %8 = vsyncpa [#allocation4], 0
    // Predicated region
    $region2: #{tpu_custom_call.1} parent=1 // pred_check
      _
    $region3: #{tpu_custom_call.1} parent=1 // pred_check_branch
      %10 = sbr.rel (0) target = $region5
    $region4: #{tpu_custom_call.1} parent=1 // pred_region
      _
    $region5: #{tpu_custom_call.1} parent=1 // pred_fallthru
      _
    // Predicated region
    $region6: #{tpu_custom_call.1} parent=1 // pred_check
      _
    $region7: #{tpu_custom_call.1} parent=1 // pred_check_branch
      %12 = sbr.rel (0) target = $region9
    $region8: #{tpu_custom_call.1} parent=1 // pred_region
      _
    $region9: #{tpu_custom_call.1} parent=1 // pred_fallthru
      _
    // Predicated region
    $region10: #{tpu_custom_call.1} parent=1 // pred_check
      _
    $region11: #{tpu_custom_call.1} parent=1 // pred_check_branch
      %14 = sbr.rel (0) target = $region13
    $region12: #{tpu_custom_call.1} parent=1 // pred_region
      _
    $region13: #{tpu_custom_call.1} parent=1 // pred_fallthru
      _
    %v15 = vld [vmem:[%s0] sm:$0xff]
    %v16 = vld [vmem:[%s0 + $0x8] sm:$0xff]
    %v17 = vld [vmem:[%s1] sm:$0xff]
    %v18 = vld [vmem:[%s1 + $0x8] sm:$0xff]
    %v19 = vld [vmem:[%s1 + $0x10] sm:$0xff]
    %v20 = vld [vmem:[%s1 + $0x18] sm:$0xff]
    %vm21 = vcmask 261120
    %v23 = vsel %vm21, %v15, 0
    %v26 = vsel %vm21, %v16, 0
    %28 = vmatpush.msra.mxu0 0.0
    %29 = vmatpush.msra.mxu0 0.0
    %30 = vmatpush.msra.mxu0 0.0
    %31 = vmatpush.msra.mxu0 0.0
    %32 = vmatpush.msra.mxu0 0.0
    %33 = vmatpush.msra.mxu0 0.0
    %34 = vmatpush.msra.mxu0 0.0
    %35 = vmatpush.msra.mxu0 0.0
    %36 = vmatpush.msra.mxu0 0.0
    %37 = vmatpush.msra.mxu0 0.0
    %38 = vmatpush.msra.mxu0 0.0
    %39 = vmatpush.msra.mxu0 0.0
    %40 = vmatpush.msra.mxu0 %v20
    %41 = vmatpush.msra.mxu0 %v19
    %42 = vmatpush.msra.mxu0 %v18
    %43 = vmatpush.msra.mxu0 %v17
    %44 = vmatmul.f32.gmra.mxu0 %v23
    %v45 = vpop.f32.mrf.mxu0
    %v46 = vadd.f32 0.0, %v45
    %47 = vmatmul.f32.gmra.mxu0 %v26
    %v48 = vpop.f32.mrf.mxu0
    %v49 = vadd.f32 0.0, %v48
    %50 = vdwg.mxu0
    %v51 = vxor.u32 %v46, 2147483648
    %v52 = vxor.u32 %v49, 2147483648
    %v53 = vmul.f32 %v51, 1.442695
    %v54 = vpow.pop %v53
    %v55 = vmul.f32 %v52, 1.442695
    %v56 = vpow.pop %v55
    %v57 = vadd.f32 %v54, 1.0
    %v58 = vadd.f32 %v56, 1.0
    %v59 = vrcp.pop %v57
    %v60 = vmul.f32 %v57, %v59
    %v61 = vsub.f32 1.0, %v60
    %v62 = vmul.f32 %v59, %v61
    %v63 = vadd.f32 %v59, %v62
    %vm64 = vweird.f32 %v57
    %vm65 = vweird.f32 %v59
    %vm66 = vmor %vm64, %vm65
    %v67 = vsel %vm66, %v59, %v63
    %v68 = vand.u32 2147483647, %v57
    %vm69 = vcmp.eq.f32.partialorder %v68, 8.507059e+37
    %v70 = vand.u32 %v57, 2147483648
    %v71 = vor.u32 1.1754944e-38, %v70
    %v72 = vsel %vm69, %v71, %v67
    %v73 = vmul.f32 1.0, %v72
    %v74 = vrcp.pop %v58
    %v75 = vmul.f32 %v58, %v74
    %v76 = vsub.f32 1.0, %v75
    %v77 = vmul.f32 %v74, %v76
    %v78 = vadd.f32 %v74, %v77
    %vm79 = vweird.f32 %v58
    %vm80 = vweird.f32 %v74
    %vm81 = vmor %vm79, %vm80
    %v82 = vsel %vm81, %v74, %v78
    %v83 = vand.u32 2147483647, %v58
    %vm84 = vcmp.eq.f32.partialorder %v83, 8.507059e+37
    %v85 = vand.u32 %v58, 2147483648
    %v86 = vor.u32 1.1754944e-38, %v85
    %v87 = vsel %vm84, %v86, %v82
    %v88 = vmul.f32 1.0, %v87
    %v89 = vmul.f32 %v46, %v73
    %v90 = vmul.f32 %v49, %v88
    %93 = vrot.lane.b32.xlu0 %v46, 64
    %v94 = vpop.permute.xlu0 %93
    %95 = vrot.lane.b32.xlu0 %v49, 64
    %v96 = vpop.permute.xlu0 %95
    %v99 = vmul.f32 %v89, %v94
    %v100 = vmul.f32 %v90, %v96
    %v101 = vld [vmem:[%s2] sm:$0xff]
    %v102 = vld [vmem:[%s2 + $0x8] sm:$0xff]
    %v103 = vld [vmem:[%s2 + $0x10] sm:$0xff]
    %v104 = vld [vmem:[%s2 + $0x18] sm:$0xff]
    %v105 = vld [vmem:[%s2 + $0x20] sm:$0xff]
    %v106 = vld [vmem:[%s2 + $0x28] sm:$0xff]
    %v107 = vld [vmem:[%s2 + $0x30] sm:$0xff]
    %v108 = vld [vmem:[%s2 + $0x38] sm:$0xff]
    %vm109 = vcmask 523264
    %v111 = vsel %vm109, %v99, 0
    %v114 = vsel %vm109, %v100, 0
    %116 = vmatpush.msra.mxu0 0.0
    %117 = vmatpush.msra.mxu0 0.0
    %118 = vmatpush.msra.mxu0 0.0
    %119 = vmatpush.msra.mxu0 0.0
    %120 = vmatpush.msra.mxu0 0.0
    %121 = vmatpush.msra.mxu0 0.0
    %122 = vmatpush.msra.mxu0 0.0
    %123 = vmatpush.msra.mxu0 0.0
    %124 = vmatpush.msra.mxu0 %v108
    %125 = vmatpush.msra.mxu0 %v107
    %126 = vmatpush.msra.mxu0 %v106
    %127 = vmatpush.msra.mxu0 %v105
    %128 = vmatpush.msra.mxu0 %v104
    %129 = vmatpush.msra.mxu0 %v103
    %130 = vmatpush.msra.mxu0 %v102
    %131 = vmatpush.msra.mxu0 %v101
    %132 = vmatmul.f32.gmra.mxu0 %v111
    %v133 = vpop.f32.mrf.mxu0
    %v134 = vadd.f32 0.0, %v133
    %135 = vmatmul.f32.gmra.mxu0 %v114
    %v136 = vpop.f32.mrf.mxu0
    %v137 = vadd.f32 0.0, %v136
    %138 = vdwg.mxu0
    %p139 = scmp.eq.s32.totalorder 0, 0
    // Predicated region
    $region14: #{tpu_custom_call.1} parent=1 // pred_check
      %p140 = pneg %p139
    $region15: #{tpu_custom_call.1} parent=1 // pred_check_branch
      %142 = sbr.rel (%p140) target = $region17
    $region16: #{tpu_custom_call.1} parent=1 // pred_region
      %143 = vst.msk [vmem:[#allocation2] sm:$0xff] %vm21, %v134
      %144 = vst.msk [vmem:[#allocation2 + $0x8] sm:$0xff] %vm21, %v137
    $region17: #{tpu_custom_call.1} parent=1 // pred_fallthru
      _
    %p145 = scmp.gt.s32.totalorder 0, 0
    // Predicated region
    $region18: #{tpu_custom_call.1} parent=1 // pred_check
      %p146 = pneg %p145
    $region19: #{tpu_custom_call.1} parent=1 // pred_check_branch
      %148 = sbr.rel (%p146) target = $region21
    $region20: #{tpu_custom_call.1} parent=1 // pred_region
      %v149 = vld [vmem:[#allocation2] sm:$0xff]
      %v150 = vld [vmem:[#allocation2 + $0x8] sm:$0xff]
      %v151 = vadd.f32 %v149, %v134
      %v152 = vadd.f32 %v150, %v137
      %153 = vst.msk [vmem:[#allocation2] sm:$0xff] %vm21, %v151
      %154 = vst.msk [vmem:[#allocation2 + $0x8] sm:$0xff] %vm21, %v152
    $region21: #{tpu_custom_call.1} parent=1 // pred_fallthru
      _
    // Predicated region
    $region22: #{tpu_custom_call.1} parent=1 // pred_check
      %p155 = pneg %p139
    $region23: #{tpu_custom_call.1} parent=1 // pred_check_branch
      %157 = sbr.rel (%p155) target = $region25
    $region24: #{tpu_custom_call.1} parent=1 // pred_region
      %v158 = vld [vmem:[#allocation2] sm:$0xff]
      %v159 = vld [vmem:[#allocation2 + $0x8] sm:$0xff]
      %160 = vst.msk [vmem:[#allocation3] sm:$0xff] %vm21, %v158
      %161 = vst.msk [vmem:[#allocation3 + $0x8] sm:$0xff] %vm21, %v159
    $region25: #{tpu_custom_call.1} parent=1 // pred_fallthru
      _
    // Predicated region
    $region26: #{tpu_custom_call.1} parent=1 // pred_check
      _
    $region27: #{tpu_custom_call.1} parent=1 // pred_check_branch
      %163 = sbr.rel (0) target = $region29
    $region28: #{tpu_custom_call.1} parent=1 // pred_region
      %165 = vsyncadd [#allocation4], 0
      %s166 = sshll.u32 [#allocation3], 4
      %s167 = int_to_ptr.vmem [resolvable:$true] %s166
      %s168 = sshll.u32 %s3, 4
      %s169 = int_to_ptr.hbm [resolvable:$true] %s168
      %174 = dma.vmem_to_hbm [thread:$0]  %s167, 256, %s169, [#allocation4], 128, 128, 8
    $region29: #{tpu_custom_call.1} parent=1 // pred_fallthru
      _
    // Predicated region
    $region30: #{tpu_custom_call.1} parent=1 // pred_check
      _
    $region31: #{tpu_custom_call.1} parent=1 // pred_check_branch
      %176 = sbr.rel (0) target = $region33
    $region32: #{tpu_custom_call.1} parent=1 // pred_region
      %178 = dma.done [#allocation4], 256
    $region33: #{tpu_custom_call.1} parent=1 // pred_fallthru
      _
    %179 = vsyncpa [#allocation4], 1

</llo_original>
